<compile_context>
chip_gen: v7x
topology: tpu7x:2x2x1
jax: 0.10.0
libtpu: 0.0.40
codegen_flags: <defaults>
</compile_context>

<pallas_src>
import functools

import numpy as np
import jax
import jax.numpy as jnp
from jax.experimental import pallas as pl
from jax.experimental.pallas import tpu as pltpu


def _round_up(x, m):
    return -(-x // m) * m


def _pick_dff_tile(d_model, d_ff, compute_itemsize, max_weight_bytes=24 << 20):
    """Pick the d_ff chunk: full residency if the (single-buffered) W1+W2 pair
    fits the budget, else the largest 128-multiple divisor of d_ff whose
    double-buffered streamed chunks stay within budget."""
    if 2 * d_model * d_ff * compute_itemsize <= max_weight_bytes:
        return d_ff
    # Streamed: per d_ff column we hold one W1 column + one W2 row, x2 buffers.
    per_col = 2 * d_model * compute_itemsize * 2
    max_tk = max(128, (max_weight_bytes // per_col) // 128 * 128)
    tk = min(max_tk, d_ff) // 128 * 128
    while tk >= 128:
        if d_ff % tk == 0:
            return tk
        tk -= 128
    return d_ff  # no clean 128-multiple divisor; fall back to full residency


def _ffn_kernel(x_ref, w1_ref, b1_ref, w2_ref, b2_ref, o_ref, acc_ref):
    """Grid step (i, k): row tile i of x, d_ff chunk k of the weights.

    x_ref  : (tn, d_model)        input row tile (original dtype)
    w1_ref : (d_model, tk)        w_1.weight.T chunk (compute dtype, e.g. bf16)
    b1_ref : (1, tk)              w_1.bias chunk (f32)
    w2_ref : (tk, d_model)        w_2.weight.T chunk (compute dtype)
    b2_ref : (1, d_model)         w_2.bias (f32)
    o_ref  : (tn, d_model)        output row tile (original dtype)
    acc_ref: (tn, d_model) f32    second-matmul accumulator (resident across k)
    """
    k = pl.program_id(1)

    # h = relu(x @ W1[:, chunk] + b1[chunk]) -- MXU matmul with f32
    # accumulation; bias + ReLU in f32 on the VPU.
    xc = x_ref[...].astype(w1_ref.dtype)
    h = jnp.dot(xc, w1_ref[...], preferred_element_type=jnp.float32)
    h = jnp.maximum(h + b1_ref[...], 0.0)

    # TODO(synk): nn.Dropout is identity in eval mode (implemented); a
    # training-mode kernel would pltpu.prng_seed(...) and mask h with
    # pltpu.stateful_bernoulli before the second matmul.

    # Partial second matmul for this d_ff chunk, accumulated in f32.
    contrib = jnp.dot(h.astype(w2_ref.dtype), w2_ref[...],
                      preferred_element_type=jnp.float32)

    @pl.when(k == 0)
    def _():
        acc_ref[...] = contrib

    @pl.when(k > 0)
    def _():
        acc_ref[...] += contrib

    @pl.when(k == pl.num_programs(1) - 1)
    def _():
        o_ref[...] = (acc_ref[...] + b2_ref[...]).astype(o_ref.dtype)


def prepare_ffn_params(w1, b1, w2, b2, compute_dtype=jnp.bfloat16):
    """Hoisted out of the per-call path (do this once at parameter setup):
    transpose torch-layout (out, in) weights to (in, out) and cast to the MXU
    compute dtype.  Biases stay f32 (added to the f32 accumulators)."""
    d_ff, d_model = w1.shape
    w1t = jnp.asarray(w1).astype(compute_dtype).T            # (d_model, d_ff)
    w2t = jnp.asarray(w2).astype(compute_dtype).T            # (d_ff, d_model)
    b1r = jnp.asarray(b1, jnp.float32).reshape(1, d_ff)
    b2r = jnp.asarray(b2, jnp.float32).reshape(1, d_model)
    return w1t, b1r, w2t, b2r


def _wspec(shape, index_map, mode):
    # Only pass pipeline_mode when we actually want a non-default buffering
    # hint (keeps the fallback path free of the kwarg entirely).
    if mode is None:
        return pl.BlockSpec(shape, index_map)
    return pl.BlockSpec(shape, index_map, pipeline_mode=mode)


def _build_and_call(x2, w1t, b1r, w2t, b2r, *, tn, tk, vmem_limit, single_buffer):
    n, d_model = x2.shape
    d_ff = w1t.shape[1]
    grid = (pl.cdiv(n, tn), d_ff // tk)
    # Constant-index blocks (fully resident weights/biases) don't need double
    # buffering; streamed chunks keep the default (2) to hide their DMA.
    w_mode = pl.Buffered(1) if single_buffer else None

    return pl.pallas_call(
        _ffn_kernel,
        out_shape=jax.ShapeDtypeStruct((n, d_model), x2.dtype),
        grid_spec=pltpu.PrefetchScalarGridSpec(
            num_scalar_prefetch=0,
            grid=grid,
            in_specs=[
                pl.BlockSpec((tn, d_model), lambda i, k: (i, 0)),      # x rows
                _wspec((d_model, tk), lambda i, k: (0, k), w_mode),    # W1^T
                _wspec((1, tk), lambda i, k: (0, k), w_mode),          # b1
                _wspec((tk, d_model), lambda i, k: (k, 0), w_mode),    # W2^T
                _wspec((1, d_model), lambda i, k: (0, 0), w_mode),     # b2
            ],
            out_specs=pl.BlockSpec((tn, d_model), lambda i, k: (i, 0)),
            scratch_shapes=[pltpu.VMEM((tn, d_model), jnp.float32)],
        ),
        compiler_params=pltpu.CompilerParams(
            dimension_semantics=("parallel", "arbitrary"),
            vmem_limit_bytes=vmem_limit,
        ),
    )(x2, w1t, b1r, w2t, b2r)


def positionwise_feed_forward(x, params, *, block_rows=256, dff_tile=None):
    """Fused FFN forward.  `params` = prepare_ffn_params(...) (call once).

    x: (..., d_model) -> (..., d_model), same dtype as x.
    """
    w1t, b1r, w2t, b2r = params
    d_model = x.shape[-1]
    d_ff = w1t.shape[1]
    assert w1t.shape == (d_model, d_ff) and w2t.shape == (d_ff, d_model)

    orig_shape = x.shape
    x2 = x.reshape(-1, d_model)
    n = x2.shape[0]

    # Row tile: large enough to amortize per-step overhead, rounded to the
    # sublane packing granule of x's dtype (8 rows f32, 16 bf16, 32 int8).
    x_item = x2.dtype.itemsize
    granule = max(8, 32 // max(1, x_item))
    tn = min(_round_up(block_rows, granule), _round_up(n, granule))

    # d_ff chunking (must tile d_ff exactly -- it's a reduction axis).
    c_item = w1t.dtype.itemsize
    tk = dff_tile if dff_tile is not None else _pick_dff_tile(d_model, d_ff, c_item)
    if d_ff % tk != 0:
        tk = d_ff
    k_tiles = d_ff // tk
    weights_resident = (k_tiles == 1)

    # VMEM budget: weight/bias buffers (x2 when streamed), double-buffered
    # x/out row tiles, f32 accumulator, f32 `h` intermediate (may spill).
    wbuf = 1 if weights_resident else 2
    needed = (wbuf * 2 * d_model * tk * c_item          # W1^T + W2^T chunks
              + wbuf * tk * 4 + d_model * 4             # b1 chunk, b2 (f32)
              + 2 * 2 * tn * d_model * x_item           # x + out tiles, 2-deep
              + tn * d_model * 4                        # f32 accumulator
              + 2 * tn * tk * 4)                        # f32 h headroom
    vmem_limit = int(min(max(needed + needed // 2, 32 << 20), 64 << 20))

    call = functools.partial(_build_and_call, x2, w1t, b1r, w2t, b2r,
                             tn=tn, tk=tk, vmem_limit=vmem_limit)
    if weights_resident:
        try:
            out = call(single_buffer=True)
        except Exception:
            # This jax build rejected the pl.Buffered(1) hint; the kernel is
            # identical otherwise, so rerun with default double buffering.
            out = call(single_buffer=False)
    else:
        out = call(single_buffer=False)

    return out.reshape(orig_shape)


if __name__ == "__main__":
    # Small shapes consistent with the module: (batch, seq, d_model), d_ff.
    B, S, d_model, d_ff = 2, 8, 32, 64
    key = jax.random.PRNGKey(0)
    kx, k1, kb1, k2, kb2 = jax.random.split(key, 5)

    x = jax.random.normal(kx, (B, S, d_model), jnp.float32)
    # torch nn.Linear parameter layout: weight is (out_features, in_features).
    w1 = jax.random.normal(k1, (d_ff, d_model), jnp.float32) * 0.1
    b1 = jax.random.normal(kb1, (d_ff,), jnp.float32) * 0.1
    w2 = jax.random.normal(k2, (d_model, d_ff), jnp.float32) * 0.1
    b2 = jax.random.normal(kb2, (d_model,), jnp.float32) * 0.1

    # Pure-JAX eval-mode reference (dropout == identity).
    ref = jnp.maximum(x @ w1.T + b1, 0.0) @ w2.T + b2

    # f32 compute path: tight numerical check against the reference.
    params_f32 = prepare_ffn_params(w1, b1, w2, b2, compute_dtype=jnp.float32)
    out_f32 = jax.block_until_ready(positionwise_feed_forward(x, params_f32))
    np.testing.assert_allclose(np.array(out_f32), np.array(ref),
                               rtol=1e-5, atol=1e-5)

    # bf16 compute path (production config: MXU-native operands, f32 accum).
    params_bf16 = prepare_ffn_params(w1, b1, w2, b2, compute_dtype=jnp.bfloat16)
    out_bf16 = jax.block_until_ready(positionwise_feed_forward(x, params_bf16))
    np.testing.assert_allclose(np.array(out_bf16), np.array(ref),
                               rtol=5e-2, atol=5e-2)

    print("KERNEL_OK")
</pallas_src>

<mosaic_0001>
module attributes {stable_mosaic.version = 11 : i64} {
  func.func @_ffn_kernel(%arg0: i32, %arg1: i32, %arg2: memref<16x32xf32, #tpu.memory_space<vmem>>, %arg3: memref<32x64xf32, #tpu.memory_space<vmem>>, %arg4: memref<1x64xf32, #tpu.memory_space<vmem>>, %arg5: memref<64x32xf32, #tpu.memory_space<vmem>>, %arg6: memref<1x32xf32, #tpu.memory_space<vmem>>, %arg7: memref<16x32xf32, #tpu.memory_space<vmem>>, %arg8: memref<16x32xf32, #tpu.memory_space<vmem>>) attributes {dimension_semantics = [#tpu.dimension_semantics<parallel>, #tpu.dimension_semantics<arbitrary>], iteration_bounds = array<i64: 1, 1>, scalar_prefetch = 0 : i64, scratch_operands = 1 : i64, tpu.core_type = #tpu.core_type<tc>, window_params = [{transform_indices = @transform_0, window_bounds = array<i64: 16, 32>}, {pipeline_mode = #tpu.pipeline_mode<synchronous>, transform_indices = @transform_1, window_bounds = array<i64: 32, 64>}, {pipeline_mode = #tpu.pipeline_mode<synchronous>, transform_indices = @transform_2, window_bounds = array<i64: 1, 64>}, {pipeline_mode = #tpu.pipeline_mode<synchronous>, transform_indices = @transform_3, window_bounds = array<i64: 64, 32>}, {pipeline_mode = #tpu.pipeline_mode<synchronous>, transform_indices = @transform_4, window_bounds = array<i64: 1, 32>}, {transform_indices = @transform_5, window_bounds = array<i64: 16, 32>}]} {
    %c0 = arith.constant 0 : index
    %c0_0 = arith.constant 0 : index
    %0 = vector.load %arg2[%c0, %c0_0] : memref<16x32xf32, #tpu.memory_space<vmem>>, vector<16x32xf32>
    %c0_1 = arith.constant 0 : index
    %c0_2 = arith.constant 0 : index
    %1 = vector.load %arg3[%c0_1, %c0_2] : memref<32x64xf32, #tpu.memory_space<vmem>>, vector<32x64xf32>
    %cst = arith.constant dense<0.000000e+00> : vector<16x64xf32>
    %2 = tpu.matmul %0, %1, %cst {dimension_numbers = #tpu.dot_dimension_numbers<[1], [0], [0], [1], [0, 0, 1, 1], [], []>} : vector<16x32xf32>, vector<32x64xf32>, vector<16x64xf32> -> vector<16x64xf32>
    %c0_3 = arith.constant 0 : index
    %c0_4 = arith.constant 0 : index
    %3 = vector.load %arg4[%c0_3, %c0_4] : memref<1x64xf32, #tpu.memory_space<vmem>>, vector<1x64xf32>
    %4 = vector.broadcast %3 : vector<1x64xf32> to vector<16x64xf32>
    %5 = arith.addf %2, %4 : vector<16x64xf32>
    %cst_5 = arith.constant 0.000000e+00 : f32
    %6 = vector.broadcast %cst_5 : f32 to vector<16x64xf32>
    %7 = arith.maximumf %5, %6 : vector<16x64xf32>
    %c0_6 = arith.constant 0 : index
    %c0_7 = arith.constant 0 : index
    %8 = vector.load %arg5[%c0_6, %c0_7] : memref<64x32xf32, #tpu.memory_space<vmem>>, vector<64x32xf32>
    %cst_8 = arith.constant dense<0.000000e+00> : vector<16x32xf32>
    %9 = tpu.matmul %7, %8, %cst_8 {dimension_numbers = #tpu.dot_dimension_numbers<[1], [0], [0], [1], [0, 0, 1, 1], [], []>} : vector<16x64xf32>, vector<64x32xf32>, vector<16x32xf32> -> vector<16x32xf32>
    %c0_i32 = arith.constant 0 : i32
    %10 = arith.cmpi eq, %arg1, %c0_i32 : i32
    %11 = arith.extui %10 : i1 to i32
    %c0_i32_9 = arith.constant 0 : i32
    %12 = arith.cmpi ne, %11, %c0_i32_9 : i32
    scf.if %12 {
      %c0_14 = arith.constant 0 : index
      %c0_15 = arith.constant 0 : index
      %19 = vector.load %arg8[%c0_14, %c0_15] : memref<16x32xf32, #tpu.memory_space<vmem>>, vector<16x32xf32>
      tpu.vector_store %arg8[%c0_14, %c0_15], %9 {strides = array<i32>} : memref<16x32xf32, #tpu.memory_space<vmem>>, vector<16x32xf32>,
    } else {
    }
    %c0_i32_10 = arith.constant 0 : i32
    %13 = arith.cmpi sgt, %arg1, %c0_i32_10 : i32
    %14 = arith.extui %13 : i1 to i32
    %c0_i32_11 = arith.constant 0 : i32
    %15 = arith.cmpi ne, %14, %c0_i32_11 : i32
    scf.if %15 {
      %c0_14 = arith.constant 0 : index
      %c0_15 = arith.constant 0 : index
      %19 = vector.load %arg8[%c0_14, %c0_15] : memref<16x32xf32, #tpu.memory_space<vmem>>, vector<16x32xf32>
      %20 = arith.addf %19, %9 : vector<16x32xf32>
      %c0_16 = arith.constant 0 : index
      %c0_17 = arith.constant 0 : index
      %21 = vector.load %arg8[%c0_16, %c0_17] : memref<16x32xf32, #tpu.memory_space<vmem>>, vector<16x32xf32>
      tpu.vector_store %arg8[%c0_16, %c0_17], %20 {strides = array<i32>} : memref<16x32xf32, #tpu.memory_space<vmem>>, vector<16x32xf32>,
    } else {
    }
    %c0_i32_12 = arith.constant 0 : i32
    %16 = arith.cmpi eq, %arg1, %c0_i32_12 : i32
    %17 = arith.extui %16 : i1 to i32
    %c0_i32_13 = arith.constant 0 : i32
    %18 = arith.cmpi ne, %17, %c0_i32_13 : i32
    scf.if %18 {
      %c0_14 = arith.constant 0 : index
      %c0_15 = arith.constant 0 : index
      %19 = vector.load %arg8[%c0_14, %c0_15] : memref<16x32xf32, #tpu.memory_space<vmem>>, vector<16x32xf32>
      %c0_16 = arith.constant 0 : index
      %c0_17 = arith.constant 0 : index
      %20 = vector.load %arg6[%c0_16, %c0_17] : memref<1x32xf32, #tpu.memory_space<vmem>>, vector<1x32xf32>
      %21 = vector.broadcast %20 : vector<1x32xf32> to vector<16x32xf32>
      %22 = arith.addf %19, %21 : vector<16x32xf32>
      %c0_18 = arith.constant 0 : index
      %c0_19 = arith.constant 0 : index
      %23 = vector.load %arg7[%c0_18, %c0_19] : memref<16x32xf32, #tpu.memory_space<vmem>>, vector<16x32xf32>
      tpu.vector_store %arg7[%c0_18, %c0_19], %22 {strides = array<i32>} : memref<16x32xf32, #tpu.memory_space<vmem>>, vector<16x32xf32>,
    } else {
    }
    return
  }
  func.func @transform_0(%arg0: i32, %arg1: i32) -> (i32, i32) {
    %c0_i32 = arith.constant 0 : i32
    %c0_i32_0 = arith.constant 0 : i32
    return %arg0, %c0_i32 : i32, i32
  }
  func.func @transform_1(%arg0: i32, %arg1: i32) -> (i32, i32) {
    %c0_i32 = arith.constant 0 : i32
    %c0_i32_0 = arith.constant 0 : i32
    return %c0_i32, %arg1 : i32, i32
  }
  func.func @transform_2(%arg0: i32, %arg1: i32) -> (i32, i32) {
    %c0_i32 = arith.constant 0 : i32
    %c0_i32_0 = arith.constant 0 : i32
    return %c0_i32, %arg1 : i32, i32
  }
  func.func @transform_3(%arg0: i32, %arg1: i32) -> (i32, i32) {
    %c0_i32 = arith.constant 0 : i32
    %c0_i32_0 = arith.constant 0 : i32
    return %arg1, %c0_i32 : i32, i32
  }
  func.func @transform_4(%arg0: i32, %arg1: i32) -> (i32, i32) {
    %c0_i32 = arith.constant 0 : i32
    %c0_i32_0 = arith.constant 0 : i32
    %c0_i32_1 = arith.constant 0 : i32
    return %c0_i32, %c0_i32_0 : i32, i32
  }
  func.func @transform_5(%arg0: i32, %arg1: i32) -> (i32, i32) {
    %c0_i32 = arith.constant 0 : i32
    %c0_i32_0 = arith.constant 0 : i32
    return %arg0, %c0_i32 : i32, i32
  }
}

module attributes {stable_mosaic.version = 11 : i64} {
  func.func @_ffn_kernel(%arg0: i32, %arg1: i32, %arg2: memref<16x32xf32, #tpu.memory_space<vmem>>, %arg3: memref<32x64xf32, #tpu.memory_space<vmem>>, %arg4: memref<1x64xf32, #tpu.memory_space<vmem>>, %arg5: memref<64x32xf32, #tpu.memory_space<vmem>>, %arg6: memref<1x32xf32, #tpu.memory_space<vmem>>, %arg7: memref<16x32xf32, #tpu.memory_space<vmem>>, %arg8: memref<16x32xf32, #tpu.memory_space<vmem>>) attributes {dimension_semantics = [#tpu.dimension_semantics<parallel>, #tpu.dimension_semantics<arbitrary>], iteration_bounds = array<i64: 1, 1>, scalar_prefetch = 0 : i64, scratch_operands = 1 : i64, tpu.core_type = #tpu.core_type<tc>, window_params = [{transform_indices = @transform_0, window_bounds = array<i64: 16, 32>}, {transform_indices = @transform_1, window_bounds = array<i64: 32, 64>}, {transform_indices = @transform_2, window_bounds = array<i64: 1, 64>}, {transform_indices = @transform_3, window_bounds = array<i64: 64, 32>}, {pipeline_mode = #tpu.pipeline_mode<synchronous>, transform_indices = @transform_4, window_bounds = array<i64: 1, 32>}, {transform_indices = @transform_5, window_bounds = array<i64: 16, 32>}]} {
    %c0 = arith.constant 0 : index
    %c0_0 = arith.constant 0 : index
    %0 = vector.load %arg2[%c0, %c0_0] : memref<16x32xf32, #tpu.memory_space<vmem>>, vector<16x32xf32>
    %c0_1 = arith.constant 0 : index
    %c0_2 = arith.constant 0 : index
    %1 = vector.load %arg3[%c0_1, %c0_2] : memref<32x64xf32, #tpu.memory_space<vmem>>, vector<32x64xf32>
    %cst = arith.constant dense<0.000000e+00> : vector<16x64xf32>
    %2 = tpu.matmul %0, %1, %cst {dimension_numbers = #tpu.dot_dimension_numbers<[1], [0], [0], [1], [0, 0, 1, 1], [], []>} : vector<16x32xf32>, vector<32x64xf32>, vector<16x64xf32> -> vector<16x64xf32>
    %c0_3 = arith.constant 0 : index
    %c0_4 = arith.constant 0 : index
    %3 = vector.load %arg4[%c0_3, %c0_4] : memref<1x64xf32, #tpu.memory_space<vmem>>, vector<1x64xf32>
    %4 = vector.broadcast %3 : vector<1x64xf32> to vector<16x64xf32>
    %5 = arith.addf %2, %4 : vector<16x64xf32>
    %cst_5 = arith.constant 0.000000e+00 : f32
    %6 = vector.broadcast %cst_5 : f32 to vector<16x64xf32>
    %7 = arith.maximumf %5, %6 : vector<16x64xf32>
    %c0_6 = arith.constant 0 : index
    %c0_7 = arith.constant 0 : index
    %8 = vector.load %arg5[%c0_6, %c0_7] : memref<64x32xf32, #tpu.memory_space<vmem>>, vector<64x32xf32>
    %cst_8 = arith.constant dense<0.000000e+00> : vector<16x32xf32>
    %9 = tpu.matmul %7, %8, %cst_8 {dimension_numbers = #tpu.dot_dimension_numbers<[1], [0], [0], [1], [0, 0, 1, 1], [], []>} : vector<16x64xf32>, vector<64x32xf32>, vector<16x32xf32> -> vector<16x32xf32>
    %c0_i32 = arith.constant 0 : i32
    %10 = arith.cmpi eq, %arg1, %c0_i32 : i32
    %11 = arith.extui %10 : i1 to i32
    %c0_i32_9 = arith.constant 0 : i32
    %12 = arith.cmpi ne, %11, %c0_i32_9 : i32
    scf.if %12 {
      %c0_14 = arith.constant 0 : index
      %c0_15 = arith.constant 0 : index
      %19 = vector.load %arg8[%c0_14, %c0_15] : memref<16x32xf32, #tpu.memory_space<vmem>>, vector<16x32xf32>
      tpu.vector_store %arg8[%c0_14, %c0_15], %9 {strides = array<i32>} : memref<16x32xf32, #tpu.memory_space<vmem>>, vector<16x32xf32>,
    } else {
    }
    %c0_i32_10 = arith.constant 0 : i32
    %13 = arith.cmpi sgt, %arg1, %c0_i32_10 : i32
    %14 = arith.extui %13 : i1 to i32
    %c0_i32_11 = arith.constant 0 : i32
    %15 = arith.cmpi ne, %14, %c0_i32_11 : i32
    scf.if %15 {
      %c0_14 = arith.constant 0 : index
      %c0_15 = arith.constant 0 : index
      %19 = vector.load %arg8[%c0_14, %c0_15] : memref<16x32xf32, #tpu.memory_space<vmem>>, vector<16x32xf32>
      %20 = arith.addf %19, %9 : vector<16x32xf32>
      %c0_16 = arith.constant 0 : index
      %c0_17 = arith.constant 0 : index
      %21 = vector.load %arg8[%c0_16, %c0_17] : memref<16x32xf32, #tpu.memory_space<vmem>>, vector<16x32xf32>
      tpu.vector_store %arg8[%c0_16, %c0_17], %20 {strides = array<i32>} : memref<16x32xf32, #tpu.memory_space<vmem>>, vector<16x32xf32>,
    } else {
    }
    %c0_i32_12 = arith.constant 0 : i32
    %16 = arith.cmpi eq, %arg1, %c0_i32_12 : i32
    %17 = arith.extui %16 : i1 to i32
    %c0_i32_13 = arith.constant 0 : i32
    %18 = arith.cmpi ne, %17, %c0_i32_13 : i32
    scf.if %18 {
      %c0_14 = arith.constant 0 : index
      %c0_15 = arith.constant 0 : index
      %19 = vector.load %arg8[%c0_14, %c0_15] : memref<16x32xf32, #tpu.memory_space<vmem>>, vector<16x32xf32>
      %c0_16 = arith.constant 0 : index
      %c0_17 = arith.constant 0 : index
      %20 = vector.load %arg6[%c0_16, %c0_17] : memref<1x32xf32, #tpu.memory_space<vmem>>, vector<1x32xf32>
      %21 = vector.broadcast %20 : vector<1x32xf32> to vector<16x32xf32>
      %22 = arith.addf %19, %21 : vector<16x32xf32>
      %c0_18 = arith.constant 0 : index
      %c0_19 = arith.constant 0 : index
      %23 = vector.load %arg7[%c0_18, %c0_19] : memref<16x32xf32, #tpu.memory_space<vmem>>, vector<16x32xf32>
      tpu.vector_store %arg7[%c0_18, %c0_19], %22 {strides = array<i32>} : memref<16x32xf32, #tpu.memory_space<vmem>>, vector<16x32xf32>,
    } else {
    }
    return
  }
  func.func @transform_0(%arg0: i32, %arg1: i32) -> (i32, i32) {
    %c0_i32 = arith.constant 0 : i32
    %c0_i32_0 = arith.constant 0 : i32
    return %arg0, %c0_i32 : i32, i32
  }
  func.func @transform_1(%arg0: i32, %arg1: i32) -> (i32, i32) {
    %c0_i32 = arith.constant 0 : i32
    %c0_i32_0 = arith.constant 0 : i32
    return %c0_i32, %arg1 : i32, i32
  }
  func.func @transform_2(%arg0: i32, %arg1: i32) -> (i32, i32) {
    %c0_i32 = arith.constant 0 : i32
    %c0_i32_0 = arith.constant 0 : i32
    return %c0_i32, %arg1 : i32, i32
  }
  func.func @transform_3(%arg0: i32, %arg1: i32) -> (i32, i32) {
    %c0_i32 = arith.constant 0 : i32
    %c0_i32_0 = arith.constant 0 : i32
    return %arg1, %c0_i32 : i32, i32
  }
  func.func @transform_4(%arg0: i32, %arg1: i32) -> (i32, i32) {
    %c0_i32 = arith.constant 0 : i32
    %c0_i32_0 = arith.constant 0 : i32
    %c0_i32_1 = arith.constant 0 : i32
    return %c0_i32, %c0_i32_0 : i32, i32
  }
  func.func @transform_5(%arg0: i32, %arg1: i32) -> (i32, i32) {
    %c0_i32 = arith.constant 0 : i32
    %c0_i32_0 = arith.constant 0 : i32
    return %arg0, %c0_i32 : i32, i32
  }
}

</mosaic_0001>

<llo_original>
// kernel: tpu_custom_call.1
$region0: #{tpu_custom_call.1}
  #allocation0 [shape = 'u32[]', space=smem, size = 0x4, offset = 0x4, fixed_abs, tag = 'smem constant byte address 0x4 - core index']
  #allocation1 [shape = 'u32[144,128]{1,0:T(1,128)}', space=vmem, size = 0x12000, scoped, tag = 'internal scratch']
  #allocation2 [shape = 'f32[16,32]{1,0:T(8,128)}', space=vmem, size = 0x2000, scoped, tag = 'scratch operand']
  %s0 = inlined_call_operand.vmem [shape: f32[16,32], index: 0, kind: input, shape index: {}]
  %s1 = inlined_call_operand.vmem [shape: f32[32,64], index: 1, kind: input, shape index: {}]
  %s2 = inlined_call_operand.vmem [shape: f32[1,64], index: 2, kind: input, shape index: {}]
  %s3 = inlined_call_operand.vmem [shape: f32[64,32], index: 3, kind: input, shape index: {}]
  %s4 = inlined_call_operand.vmem [shape: f32[1,32], index: 4, kind: input, shape index: {}]
  %s5 = inlined_call_operand.hbm [shape: f32[16,32], index: 5, kind: output, shape index: {}]
  %s6 = sld [smem:[#allocation0]]
  $region42: #{tpu_custom_call.1} parent=0
    _
  %s8 = ssub.s32 1, %s6
  %s9 = scalar_select 0, %s8, %s6
  $region1: #{tpu_custom_call.1} parent=0
    #allocation3 [shape = 'u8[8192]{0}', space=vmem, size = 0x2000, scoped, tag = 'output window, operand 0, single buffered']
    #allocation4 [shape = 's32[1]{0}', space=sflag, size = 0x4, scoped, tag = 'scoped memory for tpu_custom_call.1']
    %10 = vsyncpa [#allocation4], 0
    // Predicated region
    $region2: #{tpu_custom_call.1} parent=1 // pred_check
      _
    $region3: #{tpu_custom_call.1} parent=1 // pred_check_branch
      %12 = sbr.rel (0) target = $region5
    $region4: #{tpu_custom_call.1} parent=1 // pred_region
      _
    $region5: #{tpu_custom_call.1} parent=1 // pred_fallthru
      _
    // Predicated region
    $region6: #{tpu_custom_call.1} parent=1 // pred_check
      _
    $region7: #{tpu_custom_call.1} parent=1 // pred_check_branch
      %14 = sbr.rel (0) target = $region9
    $region8: #{tpu_custom_call.1} parent=1 // pred_region
      _
    $region9: #{tpu_custom_call.1} parent=1 // pred_fallthru
      _
    // Predicated region
    $region10: #{tpu_custom_call.1} parent=1 // pred_check
      _
    $region11: #{tpu_custom_call.1} parent=1 // pred_check_branch
      %16 = sbr.rel (0) target = $region13
    $region12: #{tpu_custom_call.1} parent=1 // pred_region
      _
    $region13: #{tpu_custom_call.1} parent=1 // pred_fallthru
      _
    // Predicated region
    $region14: #{tpu_custom_call.1} parent=1 // pred_check
      _
    $region15: #{tpu_custom_call.1} parent=1 // pred_check_branch
      %18 = sbr.rel (0) target = $region17
    $region16: #{tpu_custom_call.1} parent=1 // pred_region
      _
    $region17: #{tpu_custom_call.1} parent=1 // pred_fallthru
      _
    // Predicated region
    $region18: #{tpu_custom_call.1} parent=1 // pred_check
      _
    $region19: #{tpu_custom_call.1} parent=1 // pred_check_branch
      %20 = sbr.rel (0) target = $region21
    $region20: #{tpu_custom_call.1} parent=1 // pred_region
      _
    $region21: #{tpu_custom_call.1} parent=1 // pred_fallthru
      _
    %v21 = vld [vmem:[%s0] sm:$0xff]
    %v22 = vld [vmem:[%s0 + $0x8] sm:$0xff]
    %v23 = vld [vmem:[%s1] sm:$0xff]
    %v24 = vld [vmem:[%s1 + $0x8] sm:$0xff]
    %v25 = vld [vmem:[%s1 + $0x10] sm:$0xff]
    %v26 = vld [vmem:[%s1 + $0x18] sm:$0xff]
    %v27 = vld [vmem:[%s2] sm:$0x1]
    %v29 = vlaneseq
    %v30 = vshrl.u32 %v29, 7
    %v31 = vsub.s32 0, %v30
    %v32 = vrot.slane %v27, %v31
    %vm34 = vcmask 261120
    %v36 = vsel %vm34, %v21, 0
    %v39 = vsel %vm34, %v22, 0
    %41 = vmatprep.subr.mxu0 0.0
    %42 = vmatpush1.msra.mxu0 %v23
    %43 = vmatprep.subr.mxu0 0.0
    %44 = vmatpush1.msra.mxu0 %v24
    %45 = vmatprep.subr.mxu0 0.0
    %46 = vmatpush1.msra.mxu0 %v25
    %47 = vmatprep.subr.mxu0 0.0
    %48 = vmatpush1.msra.mxu0 %v26
    %49 = vmatprep.subr.mxu0 0.0
    %50 = vmatpush1.msra.mxu0 0.0
    %51 = vmatprep.subr.mxu0 0.0
    %52 = vmatpush1.msra.mxu0 0.0
    %53 = vmatprep.subr.mxu0 0.0
    %54 = vmatpush1.msra.mxu0 0.0
    %55 = vmatprep.subr.mxu0 0.0
    %56 = vmatpush1.msra.mxu0 0.0
    %57 = vmatprep.subr.mxu0 0.0
    %58 = vmatpush1.msra.mxu0 0.0
    %59 = vmatprep.subr.mxu0 0.0
    %60 = vmatpush1.msra.mxu0 0.0
    %61 = vmatprep.subr.mxu0 0.0
    %62 = vmatpush1.msra.mxu0 0.0
    %63 = vmatprep.subr.mxu0 0.0
    %64 = vmatpush1.msra.mxu0 0.0
    %65 = vmatprep.subr.mxu0 0.0
    %66 = vmatpush1.msra.mxu0 0.0
    %67 = vmatprep.subr.mxu0 0.0
    %68 = vmatpush1.msra.mxu0 0.0
    %69 = vmatprep.subr.mxu0 0.0
    %70 = vmatpush1.msra.mxu0 0.0
    %71 = vmatprep.subr.mxu0 0.0
    %72 = vmatpush1.msra.mxu0 0.0
    %73 = vmatprep.subr.mxu0 0.0
    %74 = vmatpush1.msra.mxu0 0.0
    %75 = vmatprep.subr.mxu0 0.0
    %76 = vmatpush1.msra.mxu0 0.0
    %77 = vmatprep.subr.mxu0 0.0
    %78 = vmatpush1.msra.mxu0 0.0
    %79 = vmatprep.subr.mxu0 0.0
    %80 = vmatpush1.msra.mxu0 0.0
    %81 = vmatprep.subr.mxu0 0.0
    %82 = vmatpush1.msra.mxu0 0.0
    %83 = vmatprep.subr.mxu0 0.0
    %84 = vmatpush1.msra.mxu0 0.0
    %85 = vmatprep.subr.mxu0 0.0
    %86 = vmatpush1.msra.mxu0 0.0
    %87 = vmatprep.subr.mxu0 0.0
    %88 = vmatpush1.msra.mxu0 0.0
    %89 = vmatprep.subr.mxu0 0.0
    %90 = vmatpush1.msra.mxu0 0.0
    %91 = vmatprep.subr.mxu0 0.0
    %92 = vmatpush1.msra.mxu0 0.0
    %93 = vmatprep.subr.mxu0 0.0
    %94 = vmatpush1.msra.mxu0 0.0
    %95 = vmatprep.subr.mxu0 0.0
    %96 = vmatpush1.msra.mxu0 0.0
    %97 = vmatprep.subr.mxu0 0.0
    %98 = vmatpush1.msra.mxu0 0.0
    %99 = vmatprep.subr.mxu0 0.0
    %100 = vmatpush1.msra.mxu0 0.0
    %101 = vmatprep.subr.mxu0 0.0
    %102 = vmatpush1.msra.mxu0 0.0
    %103 = vmatprep.subr.mxu0 0.0
    %104 = vmatpush1.msra.mxu0 0.0
    %105 = vmatprep.mubr.f32.mxu0 0.0
    %106 = vmatmul.mubr.f32.gmra.mrb[0].mxu0 %v36
    %v107 = vpop.f32.mrb[0].mxu0
    %v108 = vadd.f32 %v32, %v107
    %v109 = vpop.f32.mrb[0].mxu0
    %110 = vmatprep.mubr.f32.mxu0 0.0
    %111 = vmatmul.mubr.f32.gmra.mrb[0].mxu0 %v39
    %v112 = vpop.f32.mrb[0].mxu0
    %v113 = vadd.f32 %v32, %v112
    %v114 = vpop.f32.mrb[0].mxu0
    %115 = vdwg.mxu0
    %v116 = vmax.f32 %v108, 0.0
    %v117 = vmax.f32 %v113, 0.0
    %v118 = vld [vmem:[%s3] sm:$0xff]
    %v119 = vld [vmem:[%s3 + $0x8] sm:$0xff]
    %v120 = vld [vmem:[%s3 + $0x10] sm:$0xff]
    %v121 = vld [vmem:[%s3 + $0x18] sm:$0xff]
    %v122 = vld [vmem:[%s3 + $0x20] sm:$0xff]
    %v123 = vld [vmem:[%s3 + $0x28] sm:$0xff]
    %v124 = vld [vmem:[%s3 + $0x30] sm:$0xff]
    %v125 = vld [vmem:[%s3 + $0x38] sm:$0xff]
    %vm126 = vcmask 523264
    %v128 = vsel %vm126, %v116, 0
    %v131 = vsel %vm126, %v117, 0
    %133 = vmatprep.subr.mxu0 0.0
    %134 = vmatpush1.msra.mxu0 %v118
    %135 = vmatprep.subr.mxu0 0.0
    %136 = vmatpush1.msra.mxu0 %v119
    %137 = vmatprep.subr.mxu0 0.0
    %138 = vmatpush1.msra.mxu0 %v120
    %139 = vmatprep.subr.mxu0 0.0
    %140 = vmatpush1.msra.mxu0 %v121
    %141 = vmatprep.subr.mxu0 0.0
    %142 = vmatpush1.msra.mxu0 %v122
    %143 = vmatprep.subr.mxu0 0.0
    %144 = vmatpush1.msra.mxu0 %v123
    %145 = vmatprep.subr.mxu0 0.0
    %146 = vmatpush1.msra.mxu0 %v124
    %147 = vmatprep.subr.mxu0 0.0
    %148 = vmatpush1.msra.mxu0 %v125
    %149 = vmatprep.subr.mxu0 0.0
    %150 = vmatpush1.msra.mxu0 0.0
    %151 = vmatprep.subr.mxu0 0.0
    %152 = vmatpush1.msra.mxu0 0.0
    %153 = vmatprep.subr.mxu0 0.0
    %154 = vmatpush1.msra.mxu0 0.0
    %155 = vmatprep.subr.mxu0 0.0
    %156 = vmatpush1.msra.mxu0 0.0
    %157 = vmatprep.subr.mxu0 0.0
    %158 = vmatpush1.msra.mxu0 0.0
    %159 = vmatprep.subr.mxu0 0.0
    %160 = vmatpush1.msra.mxu0 0.0
    %161 = vmatprep.subr.mxu0 0.0
    %162 = vmatpush1.msra.mxu0 0.0
    %163 = vmatprep.subr.mxu0 0.0
    %164 = vmatpush1.msra.mxu0 0.0
    %165 = vmatprep.subr.mxu0 0.0
    %166 = vmatpush1.msra.mxu0 0.0
    %167 = vmatprep.subr.mxu0 0.0
    %168 = vmatpush1.msra.mxu0 0.0
    %169 = vmatprep.subr.mxu0 0.0
    %170 = vmatpush1.msra.mxu0 0.0
    %171 = vmatprep.subr.mxu0 0.0
    %172 = vmatpush1.msra.mxu0 0.0
    %173 = vmatprep.subr.mxu0 0.0
    %174 = vmatpush1.msra.mxu0 0.0
    %175 = vmatprep.subr.mxu0 0.0
    %176 = vmatpush1.msra.mxu0 0.0
    %177 = vmatprep.subr.mxu0 0.0
    %178 = vmatpush1.msra.mxu0 0.0
    %179 = vmatprep.subr.mxu0 0.0
    %180 = vmatpush1.msra.mxu0 0.0
    %181 = vmatprep.subr.mxu0 0.0
    %182 = vmatpush1.msra.mxu0 0.0
    %183 = vmatprep.subr.mxu0 0.0
    %184 = vmatpush1.msra.mxu0 0.0
    %185 = vmatprep.subr.mxu0 0.0
    %186 = vmatpush1.msra.mxu0 0.0
    %187 = vmatprep.subr.mxu0 0.0
    %188 = vmatpush1.msra.mxu0 0.0
    %189 = vmatprep.subr.mxu0 0.0
    %190 = vmatpush1.msra.mxu0 0.0
    %191 = vmatprep.subr.mxu0 0.0
    %192 = vmatpush1.msra.mxu0 0.0
    %193 = vmatprep.subr.mxu0 0.0
    %194 = vmatpush1.msra.mxu0 0.0
    %195 = vmatprep.subr.mxu0 0.0
    %196 = vmatpush1.msra.mxu0 0.0
    %197 = vmatprep.mubr.f32.mxu0 0.0
    %198 = vmatmul.mubr.f32.gmra.mrb[0].mxu0 %v128
    %v199 = vpop.f32.mrb[0].mxu0
    %v200 = vadd.f32 0.0, %v199
    %v201 = vpop.f32.mrb[0].mxu0
    %202 = vmatprep.mubr.f32.mxu0 0.0
    %203 = vmatmul.mubr.f32.gmra.mrb[0].mxu0 %v131
    %v204 = vpop.f32.mrb[0].mxu0
    %v205 = vadd.f32 0.0, %v204
    %v206 = vpop.f32.mrb[0].mxu0
    %207 = vdwg.mxu0
    %p208 = scmp.eq.s32.totalorder 0, 0
    // Predicated region
    $region22: #{tpu_custom_call.1} parent=1 // pred_check
      %p209 = pneg %p208
    $region23: #{tpu_custom_call.1} parent=1 // pred_check_branch
      %211 = sbr.rel (%p209) target = $region25
    $region24: #{tpu_custom_call.1} parent=1 // pred_region
      %212 = vst.msk [vmem:[#allocation2] sm:$0xff] %vm34, %v200
      %213 = vst.msk [vmem:[#allocation2 + $0x8] sm:$0xff] %vm34, %v205
    $region25: #{tpu_custom_call.1} parent=1 // pred_fallthru
      _
    %p214 = scmp.gt.s32.totalorder 0, 0
    // Predicated region
    $region26: #{tpu_custom_call.1} parent=1 // pred_check
      %p215 = pneg %p214
    $region27: #{tpu_custom_call.1} parent=1 // pred_check_branch
      %217 = sbr.rel (%p215) target = $region29
    $region28: #{tpu_custom_call.1} parent=1 // pred_region
      %v218 = vld [vmem:[#allocation2] sm:$0xff]
      %v219 = vld [vmem:[#allocation2 + $0x8] sm:$0xff]
      %v220 = vadd.f32 %v218, %v200
      %v221 = vadd.f32 %v219, %v205
      %222 = vst.msk [vmem:[#allocation2] sm:$0xff] %vm34, %v220
      %223 = vst.msk [vmem:[#allocation2 + $0x8] sm:$0xff] %vm34, %v221
    $region29: #{tpu_custom_call.1} parent=1 // pred_fallthru
      _
    // Predicated region
    $region30: #{tpu_custom_call.1} parent=1 // pred_check
      %p224 = pneg %p208
    $region31: #{tpu_custom_call.1} parent=1 // pred_check_branch
      %226 = sbr.rel (%p224) target = $region33
    $region32: #{tpu_custom_call.1} parent=1 // pred_region
      %v227 = vld [vmem:[#allocation2] sm:$0xff]
      %v228 = vld [vmem:[#allocation2 + $0x8] sm:$0xff]
      %v229 = vld [vmem:[%s4] sm:$0x1]
      %v231 = vlaneseq
      %v232 = vshrl.u32 %v231, 7
      %v233 = vsub.s32 0, %v232
      %v234 = vrot.slane %v229, %v233
      %v236 = vadd.f32 %v227, %v234
      %v237 = vadd.f32 %v228, %v234
      %238 = vst.msk [vmem:[#allocation3] sm:$0xff] %vm34, %v236
      %239 = vst.msk [vmem:[#allocation3 + $0x8] sm:$0xff] %vm34, %v237
    $region33: #{tpu_custom_call.1} parent=1 // pred_fallthru
      _
    // Predicated region
    $region34: #{tpu_custom_call.1} parent=1 // pred_check
      _
    $region35: #{tpu_custom_call.1} parent=1 // pred_check_branch
      %241 = sbr.rel (0) target = $region37
    $region36: #{tpu_custom_call.1} parent=1 // pred_region
      %s243 = ssub.s32 256, 256
      %244 = vsyncadd [#allocation4], %s243
      %s245 = sshll.u32 [#allocation3], 4
      %s246 = int_to_ptr.vmem [resolvable:$true] %s245
      %251 = dma.vmem_to_hbm [thread:$0]  %s246, 256, %s5, [#allocation4], 128, 128, 8
    $region37: #{tpu_custom_call.1} parent=1 // pred_fallthru
      _
    // Predicated region
    $region38: #{tpu_custom_call.1} parent=1 // pred_check
      _
    $region39: #{tpu_custom_call.1} parent=1 // pred_check_branch
      %253 = sbr.rel (0) target = $region41
    $region40: #{tpu_custom_call.1} parent=1 // pred_region
      %254 = dma.done [#allocation4], 256
    $region41: #{tpu_custom_call.1} parent=1 // pred_fallthru
      _
    %255 = vsyncpa [#allocation4], 1

// kernel: tpu_custom_call.1
$region0: #{tpu_custom_call.1}
  #allocation0 [shape = 'u32[]', space=smem, size = 0x4, offset = 0x4, fixed_abs, tag = 'smem constant byte address 0x4 - core index']
  #allocation1 [shape = 'u32[144,128]{1,0:T(1,128)}', space=vmem, size = 0x12000, scoped, tag = 'internal scratch']
  #allocation2 [shape = 'f32[16,32]{1,0:T(8,128)}', space=vmem, size = 0x2000, scoped, tag = 'scratch operand']
  %s0 = inlined_call_operand.vmem [shape: f32[16,32], index: 0, kind: input, shape index: {}]
  %s1 = inlined_call_operand.vmem [shape: f32[32,64], index: 1, kind: input, shape index: {}]
  %s2 = inlined_call_operand.vmem [shape: f32[1,64], index: 2, kind: input, shape index: {}]
  %s3 = inlined_call_operand.vmem [shape: f32[64,32], index: 3, kind: input, shape index: {}]
  %s4 = inlined_call_operand.vmem [shape: f32[1,32], index: 4, kind: input, shape index: {}]
  %s5 = inlined_call_operand.hbm [shape: f32[16,32], index: 5, kind: output, shape index: {}]
  %s6 = sld [smem:[#allocation0]]
  $region42: #{tpu_custom_call.1} parent=0
    _
  %s8 = ssub.s32 1, %s6
  %s9 = scalar_select 0, %s8, %s6
  $region1: #{tpu_custom_call.1} parent=0
    #allocation3 [shape = 'u8[8192]{0}', space=vmem, size = 0x2000, scoped, tag = 'output window, operand 0, single buffered']
    #allocation4 [shape = 's32[1]{0}', space=sflag, size = 0x4, scoped, tag = 'scoped memory for tpu_custom_call.1']
    %10 = vsyncpa [#allocation4], 0
    // Predicated region
    $region2: #{tpu_custom_call.1} parent=1 // pred_check
      _
    $region3: #{tpu_custom_call.1} parent=1 // pred_check_branch
      %12 = sbr.rel (0) target = $region5
    $region4: #{tpu_custom_call.1} parent=1 // pred_region
      _
    $region5: #{tpu_custom_call.1} parent=1 // pred_fallthru
      _
    // Predicated region
    $region6: #{tpu_custom_call.1} parent=1 // pred_check
      _
    $region7: #{tpu_custom_call.1} parent=1 // pred_check_branch
      %14 = sbr.rel (0) target = $region9
    $region8: #{tpu_custom_call.1} parent=1 // pred_region
      _
    $region9: #{tpu_custom_call.1} parent=1 // pred_fallthru
      _
    // Predicated region
    $region10: #{tpu_custom_call.1} parent=1 // pred_check
      _
    $region11: #{tpu_custom_call.1} parent=1 // pred_check_branch
      %16 = sbr.rel (0) target = $region13
    $region12: #{tpu_custom_call.1} parent=1 // pred_region
      _
    $region13: #{tpu_custom_call.1} parent=1 // pred_fallthru
      _
    // Predicated region
    $region14: #{tpu_custom_call.1} parent=1 // pred_check
      _
    $region15: #{tpu_custom_call.1} parent=1 // pred_check_branch
      %18 = sbr.rel (0) target = $region17
    $region16: #{tpu_custom_call.1} parent=1 // pred_region
      _
    $region17: #{tpu_custom_call.1} parent=1 // pred_fallthru
      _
    // Predicated region
    $region18: #{tpu_custom_call.1} parent=1 // pred_check
      _
    $region19: #{tpu_custom_call.1} parent=1 // pred_check_branch
      %20 = sbr.rel (0) target = $region21
    $region20: #{tpu_custom_call.1} parent=1 // pred_region
      _
    $region21: #{tpu_custom_call.1} parent=1 // pred_fallthru
      _
    %v21 = vld [vmem:[%s0] sm:$0xff]
    %v22 = vld [vmem:[%s0 + $0x8] sm:$0xff]
    %v23 = vld [vmem:[%s1] sm:$0xff]
    %v24 = vld [vmem:[%s1 + $0x8] sm:$0xff]
    %v25 = vld [vmem:[%s1 + $0x10] sm:$0xff]
    %v26 = vld [vmem:[%s1 + $0x18] sm:$0xff]
    %v27 = vld [vmem:[%s2] sm:$0x1]
    %v29 = vlaneseq
    %v30 = vshrl.u32 %v29, 7
    %v31 = vsub.s32 0, %v30
    %v32 = vrot.slane %v27, %v31
    %vm34 = vcmask 261120
    %v36 = vsel %vm34, %v21, 0
    %v39 = vsel %vm34, %v22, 0
    %41 = vmatprep.subr.mxu0 0.0
    %42 = vmatpush1.msra.mxu0 %v23
    %43 = vmatprep.subr.mxu0 0.0
    %44 = vmatpush1.msra.mxu0 %v24
    %45 = vmatprep.subr.mxu0 0.0
    %46 = vmatpush1.msra.mxu0 %v25
    %47 = vmatprep.subr.mxu0 0.0
    %48 = vmatpush1.msra.mxu0 %v26
    %49 = vmatprep.subr.mxu0 0.0
    %50 = vmatpush1.msra.mxu0 0.0
    %51 = vmatprep.subr.mxu0 0.0
    %52 = vmatpush1.msra.mxu0 0.0
    %53 = vmatprep.subr.mxu0 0.0
    %54 = vmatpush1.msra.mxu0 0.0
    %55 = vmatprep.subr.mxu0 0.0
    %56 = vmatpush1.msra.mxu0 0.0
    %57 = vmatprep.subr.mxu0 0.0
    %58 = vmatpush1.msra.mxu0 0.0
    %59 = vmatprep.subr.mxu0 0.0
    %60 = vmatpush1.msra.mxu0 0.0
    %61 = vmatprep.subr.mxu0 0.0
    %62 = vmatpush1.msra.mxu0 0.0
    %63 = vmatprep.subr.mxu0 0.0
    %64 = vmatpush1.msra.mxu0 0.0
    %65 = vmatprep.subr.mxu0 0.0
    %66 = vmatpush1.msra.mxu0 0.0
    %67 = vmatprep.subr.mxu0 0.0
    %68 = vmatpush1.msra.mxu0 0.0
    %69 = vmatprep.subr.mxu0 0.0
    %70 = vmatpush1.msra.mxu0 0.0
    %71 = vmatprep.subr.mxu0 0.0
    %72 = vmatpush1.msra.mxu0 0.0
    %73 = vmatprep.subr.mxu0 0.0
    %74 = vmatpush1.msra.mxu0 0.0
    %75 = vmatprep.subr.mxu0 0.0
    %76 = vmatpush1.msra.mxu0 0.0
    %77 = vmatprep.subr.mxu0 0.0
    %78 = vmatpush1.msra.mxu0 0.0
    %79 = vmatprep.subr.mxu0 0.0
    %80 = vmatpush1.msra.mxu0 0.0
    %81 = vmatprep.subr.mxu0 0.0
    %82 = vmatpush1.msra.mxu0 0.0
    %83 = vmatprep.subr.mxu0 0.0
    %84 = vmatpush1.msra.mxu0 0.0
    %85 = vmatprep.subr.mxu0 0.0
    %86 = vmatpush1.msra.mxu0 0.0
    %87 = vmatprep.subr.mxu0 0.0
    %88 = vmatpush1.msra.mxu0 0.0
    %89 = vmatprep.subr.mxu0 0.0
    %90 = vmatpush1.msra.mxu0 0.0
    %91 = vmatprep.subr.mxu0 0.0
    %92 = vmatpush1.msra.mxu0 0.0
    %93 = vmatprep.subr.mxu0 0.0
    %94 = vmatpush1.msra.mxu0 0.0
    %95 = vmatprep.subr.mxu0 0.0
    %96 = vmatpush1.msra.mxu0 0.0
    %97 = vmatprep.subr.mxu0 0.0
    %98 = vmatpush1.msra.mxu0 0.0
    %99 = vmatprep.subr.mxu0 0.0
    %100 = vmatpush1.msra.mxu0 0.0
    %101 = vmatprep.subr.mxu0 0.0
    %102 = vmatpush1.msra.mxu0 0.0
    %103 = vmatprep.subr.mxu0 0.0
    %104 = vmatpush1.msra.mxu0 0.0
    %105 = vmatprep.mubr.f32.mxu0 0.0
    %106 = vmatmul.mubr.f32.gmra.mrb[0].mxu0 %v36
    %v107 = vpop.f32.mrb[0].mxu0
    %v108 = vadd.f32 %v32, %v107
    %v109 = vpop.f32.mrb[0].mxu0
    %110 = vmatprep.mubr.f32.mxu0 0.0
    %111 = vmatmul.mubr.f32.gmra.mrb[0].mxu0 %v39
    %v112 = vpop.f32.mrb[0].mxu0
    %v113 = vadd.f32 %v32, %v112
    %v114 = vpop.f32.mrb[0].mxu0
    %115 = vdwg.mxu0
    %v116 = vmax.f32 %v108, 0.0
    %v117 = vmax.f32 %v113, 0.0
    %v118 = vld [vmem:[%s3] sm:$0xff]
    %v119 = vld [vmem:[%s3 + $0x8] sm:$0xff]
    %v120 = vld [vmem:[%s3 + $0x10] sm:$0xff]
    %v121 = vld [vmem:[%s3 + $0x18] sm:$0xff]
    %v122 = vld [vmem:[%s3 + $0x20] sm:$0xff]
    %v123 = vld [vmem:[%s3 + $0x28] sm:$0xff]
    %v124 = vld [vmem:[%s3 + $0x30] sm:$0xff]
    %v125 = vld [vmem:[%s3 + $0x38] sm:$0xff]
    %vm126 = vcmask 523264
    %v128 = vsel %vm126, %v116, 0
    %v131 = vsel %vm126, %v117, 0
    %133 = vmatprep.subr.mxu0 0.0
    %134 = vmatpush1.msra.mxu0 %v118
    %135 = vmatprep.subr.mxu0 0.0
    %136 = vmatpush1.msra.mxu0 %v119
    %137 = vmatprep.subr.mxu0 0.0
    %138 = vmatpush1.msra.mxu0 %v120
    %139 = vmatprep.subr.mxu0 0.0
    %140 = vmatpush1.msra.mxu0 %v121
    %141 = vmatprep.subr.mxu0 0.0
    %142 = vmatpush1.msra.mxu0 %v122
    %143 = vmatprep.subr.mxu0 0.0
    %144 = vmatpush1.msra.mxu0 %v123
    %145 = vmatprep.subr.mxu0 0.0
    %146 = vmatpush1.msra.mxu0 %v124
    %147 = vmatprep.subr.mxu0 0.0
    %148 = vmatpush1.msra.mxu0 %v125
    %149 = vmatprep.subr.mxu0 0.0
    %150 = vmatpush1.msra.mxu0 0.0
    %151 = vmatprep.subr.mxu0 0.0
    %152 = vmatpush1.msra.mxu0 0.0
    %153 = vmatprep.subr.mxu0 0.0
    %154 = vmatpush1.msra.mxu0 0.0
    %155 = vmatprep.subr.mxu0 0.0
    %156 = vmatpush1.msra.mxu0 0.0
    %157 = vmatprep.subr.mxu0 0.0
    %158 = vmatpush1.msra.mxu0 0.0
    %159 = vmatprep.subr.mxu0 0.0
    %160 = vmatpush1.msra.mxu0 0.0
    %161 = vmatprep.subr.mxu0 0.0
    %162 = vmatpush1.msra.mxu0 0.0
    %163 = vmatprep.subr.mxu0 0.0
    %164 = vmatpush1.msra.mxu0 0.0
    %165 = vmatprep.subr.mxu0 0.0
    %166 = vmatpush1.msra.mxu0 0.0
    %167 = vmatprep.subr.mxu0 0.0
    %168 = vmatpush1.msra.mxu0 0.0
    %169 = vmatprep.subr.mxu0 0.0
    %170 = vmatpush1.msra.mxu0 0.0
    %171 = vmatprep.subr.mxu0 0.0
    %172 = vmatpush1.msra.mxu0 0.0
    %173 = vmatprep.subr.mxu0 0.0
    %174 = vmatpush1.msra.mxu0 0.0
    %175 = vmatprep.subr.mxu0 0.0
    %176 = vmatpush1.msra.mxu0 0.0
    %177 = vmatprep.subr.mxu0 0.0
    %178 = vmatpush1.msra.mxu0 0.0
    %179 = vmatprep.subr.mxu0 0.0
    %180 = vmatpush1.msra.mxu0 0.0
    %181 = vmatprep.subr.mxu0 0.0
    %182 = vmatpush1.msra.mxu0 0.0
    %183 = vmatprep.subr.mxu0 0.0
    %184 = vmatpush1.msra.mxu0 0.0
    %185 = vmatprep.subr.mxu0 0.0
    %186 = vmatpush1.msra.mxu0 0.0
    %187 = vmatprep.subr.mxu0 0.0
    %188 = vmatpush1.msra.mxu0 0.0
    %189 = vmatprep.subr.mxu0 0.0
    %190 = vmatpush1.msra.mxu0 0.0
    %191 = vmatprep.subr.mxu0 0.0
    %192 = vmatpush1.msra.mxu0 0.0
    %193 = vmatprep.subr.mxu0 0.0
    %194 = vmatpush1.msra.mxu0 0.0
    %195 = vmatprep.subr.mxu0 0.0
    %196 = vmatpush1.msra.mxu0 0.0
    %197 = vmatprep.mubr.f32.mxu0 0.0
    %198 = vmatmul.mubr.f32.gmra.mrb[0].mxu0 %v128
    %v199 = vpop.f32.mrb[0].mxu0
    %v200 = vadd.f32 0.0, %v199
    %v201 = vpop.f32.mrb[0].mxu0
    %202 = vmatprep.mubr.f32.mxu0 0.0
    %203 = vmatmul.mubr.f32.gmra.mrb[0].mxu0 %v131
    %v204 = vpop.f32.mrb[0].mxu0
    %v205 = vadd.f32 0.0, %v204
    %v206 = vpop.f32.mrb[0].mxu0
    %207 = vdwg.mxu0
    %p208 = scmp.eq.s32.totalorder 0, 0
    // Predicated region
    $region22: #{tpu_custom_call.1} parent=1 // pred_check
      %p209 = pneg %p208
    $region23: #{tpu_custom_call.1} parent=1 // pred_check_branch
      %211 = sbr.rel (%p209) target = $region25
    $region24: #{tpu_custom_call.1} parent=1 // pred_region
      %212 = vst.msk [vmem:[#allocation2] sm:$0xff] %vm34, %v200
      %213 = vst.msk [vmem:[#allocation2 + $0x8] sm:$0xff] %vm34, %v205
    $region25: #{tpu_custom_call.1} parent=1 // pred_fallthru
      _
    %p214 = scmp.gt.s32.totalorder 0, 0
    // Predicated region
    $region26: #{tpu_custom_call.1} parent=1 // pred_check
      %p215 = pneg %p214
    $region27: #{tpu_custom_call.1} parent=1 // pred_check_branch
      %217 = sbr.rel (%p215) target = $region29
    $region28: #{tpu_custom_call.1} parent=1 // pred_region
      %v218 = vld [vmem:[#allocation2] sm:$0xff]
      %v219 = vld [vmem:[#allocation2 + $0x8] sm:$0xff]
      %v220 = vadd.f32 %v218, %v200
      %v221 = vadd.f32 %v219, %v205
      %222 = vst.msk [vmem:[#allocation2] sm:$0xff] %vm34, %v220
      %223 = vst.msk [vmem:[#allocation2 + $0x8] sm:$0xff] %vm34, %v221
    $region29: #{tpu_custom_call.1} parent=1 // pred_fallthru
      _
    // Predicated region
    $region30: #{tpu_custom_call.1} parent=1 // pred_check
      %p224 = pneg %p208
    $region31: #{tpu_custom_call.1} parent=1 // pred_check_branch
      %226 = sbr.rel (%p224) target = $region33
    $region32: #{tpu_custom_call.1} parent=1 // pred_region
      %v227 = vld [vmem:[#allocation2] sm:$0xff]
      %v228 = vld [vmem:[#allocation2 + $0x8] sm:$0xff]
      %v229 = vld [vmem:[%s4] sm:$0x1]
      %v231 = vlaneseq
      %v232 = vshrl.u32 %v231, 7
      %v233 = vsub.s32 0, %v232
      %v234 = vrot.slane %v229, %v233
      %v236 = vadd.f32 %v227, %v234
      %v237 = vadd.f32 %v228, %v234
      %238 = vst.msk [vmem:[#allocation3] sm:$0xff] %vm34, %v236
      %239 = vst.msk [vmem:[#allocation3 + $0x8] sm:$0xff] %vm34, %v237
    $region33: #{tpu_custom_call.1} parent=1 // pred_fallthru
      _
    // Predicated region
    $region34: #{tpu_custom_call.1} parent=1 // pred_check
      _
    $region35: #{tpu_custom_call.1} parent=1 // pred_check_branch
      %241 = sbr.rel (0) target = $region37
    $region36: #{tpu_custom_call.1} parent=1 // pred_region
      %s243 = ssub.s32 256, 256
      %244 = vsyncadd [#allocation4], %s243
      %s245 = sshll.u32 [#allocation3], 4
      %s246 = int_to_ptr.vmem [resolvable:$true] %s245
      %251 = dma.vmem_to_hbm [thread:$0]  %s246, 256, %s5, [#allocation4], 128, 128, 8
    $region37: #{tpu_custom_call.1} parent=1 // pred_fallthru
      _
    // Predicated region
    $region38: #{tpu_custom_call.1} parent=1 // pred_check
      _
    $region39: #{tpu_custom_call.1} parent=1 // pred_check_branch
      %253 = sbr.rel (0) target = $region41
    $region40: #{tpu_custom_call.1} parent=1 // pred_region
      %254 = dma.done [#allocation4], 256
    $region41: #{tpu_custom_call.1} parent=1 // pred_fallthru
      _
    %255 = vsyncpa [#allocation4], 1

</llo_original>
